<compile_context>
chip_gen: v6e
topology: v6e:2x2x1
jax: 0.10.0
libtpu: 0.0.40
codegen_flags: <defaults>
</compile_context>

<pallas_src>
import functools

import jax
import jax.numpy as jnp
import numpy as np
from jax.experimental import pallas as pl
from jax.experimental.pallas import tpu as pltpu

C1 = 1e-6
C2 = 1e-6


def _dists_scale_kernel(x_ref, y_ref, a_ref, b_ref, o_ref,
                        sx_ref, sy_ref, sxx_ref, syy_ref, sxy_ref,
                        *, hw, hw_tile):
    # x_ref/y_ref: (1, C, hw_tile) native dtype; a_ref/b_ref: (C, 1) f32
    # o_ref: (1, 1, 1) f32; scratch refs: (1, C, 1) f32 moment accumulators.
    t = pl.program_id(1)
    nt = pl.num_programs(1)

    x = x_ref[...].astype(jnp.float32)
    y = y_ref[...].astype(jnp.float32)

    # Mask the ragged tail tile (only generated when HW is not tile-aligned).
    if hw % hw_tile != 0:
        lane = jax.lax.broadcasted_iota(jnp.int32, x.shape, dimension=2)
        valid = (t * hw_tile + lane) < hw
        x = jnp.where(valid, x, 0.0)
        y = jnp.where(valid, y, 0.0)

    # Per-tile partial moments (single pass over the data).
    psx = jnp.sum(x, axis=-1, keepdims=True)        # (1, C, 1)
    psy = jnp.sum(y, axis=-1, keepdims=True)
    psxx = jnp.sum(x * x, axis=-1, keepdims=True)
    psyy = jnp.sum(y * y, axis=-1, keepdims=True)
    psxy = jnp.sum(x * y, axis=-1, keepdims=True)

    @pl.when(t == 0)
    def _init():
        sx_ref[...] = psx
        sy_ref[...] = psy
        sxx_ref[...] = psxx
        syy_ref[...] = psyy
        sxy_ref[...] = psxy

    @pl.when(t > 0)
    def _accumulate():
        sx_ref[...] += psx
        sy_ref[...] += psy
        sxx_ref[...] += psxx
        syy_ref[...] += psyy
        sxy_ref[...] += psxy

    @pl.when(t == nt - 1)
    def _finalize():
        inv_hw = jnp.float32(1.0 / hw)
        mx = sx_ref[...] * inv_hw
        my = sy_ref[...] * inv_hw
        # Single-pass moments; accumulators are f32 (see review precision note).
        vx = sxx_ref[...] * inv_hw - mx * mx
        vy = syy_ref[...] * inv_hw - my * my
        cxy = sxy_ref[...] * inv_hw - mx * my

        s1 = (2.0 * mx * my + C1) / (mx * mx + my * my + C1)   # structure
        s2 = (2.0 * cxy + C2) / (vx + vy + C2)                 # texture

        # Weighted channel reduction: (C,1) broadcasts against (1,C,1).
        d1 = jnp.sum(a_ref[...] * s1, axis=1, keepdims=True)   # (1, 1, 1)
        d2 = jnp.sum(b_ref[...] * s2, axis=1, keepdims=True)   # (1, 1, 1)
        o_ref[...] = d1 + d2


def _pick_hw_tile(hw, c, itemsize, target_block_bytes=2 * 1024 * 1024):
    """Largest 128-multiple HW tile keeping each input block ~<= 2 MiB.

    2 inputs x 2 pipeline buffers x 2 MiB = 8 MiB of streaming VMEM -- fits the
    default scoped VMEM on v5e (16 MiB), v6e (32 MiB) and v7x (32 MiB) with
    plenty of headroom.
    """
    if hw * c * itemsize <= target_block_bytes:
        return hw
    tile = (target_block_bytes // (c * itemsize)) // 128 * 128
    return max(128, int(tile))


def _dists_scale(x, y, alpha_k, beta_k, hw_tile=None):
    """One DISTS scale. x, y: (N, C, HW) in native dtype. alpha_k, beta_k: (C, 1) f32."""
    n, c, hw = x.shape
    if hw_tile is None:
        hw_tile = _pick_hw_tile(hw, c, jnp.dtype(x.dtype).itemsize)
    if hw <= hw_tile:
        hw_tile = hw                       # full-extent block (no 128 constraint)
    else:
        hw_tile = max(128, (hw_tile // 128) * 128)   # lane-aligned tile
    nt = pl.cdiv(hw, hw_tile)

    kernel = functools.partial(_dists_scale_kernel, hw=hw, hw_tile=hw_tile)
    out = pl.pallas_call(
        kernel,
        grid=(n, nt),
        in_specs=[
            pl.BlockSpec((1, c, hw_tile), lambda b, t: (b, 0, t)),
            pl.BlockSpec((1, c, hw_tile), lambda b, t: (b, 0, t)),
            pl.BlockSpec((c, 1), lambda b, t: (0, 0)),
            pl.BlockSpec((c, 1), lambda b, t: (0, 0)),
        ],
        out_specs=pl.BlockSpec((1, 1, 1), lambda b, t: (b, 0, 0)),
        out_shape=jax.ShapeDtypeStruct((n, 1, 1), jnp.float32),
        scratch_shapes=[pltpu.VMEM((1, c, 1), jnp.float32)] * 5,
        compiler_params=pltpu.CompilerParams(
            dimension_semantics=("parallel", "arbitrary")),
    )(x, y, alpha_k, beta_k)
    return out[:, 0, 0]  # (N,)


def dists_forward(feats1, feats2, alpha, beta, channels, hw_tile=None):
    """JAX/Pallas equivalent of DISTS.forward.

    feats1, feats2: lists of NCHW feature maps (one per scale), any float dtype.
    alpha, beta: (1, sum(channels), 1, 1) parameters.
    """
    a = jax.nn.sigmoid(alpha)
    b = jax.nn.sigmoid(beta)
    w_sum = jnp.sum(a) + jnp.sum(b)
    a = a / w_sum
    b = b / w_sum

    split_points = list(np.cumsum(channels)[:-1])
    a_splits = jnp.split(a, split_points, axis=1)
    b_splits = jnp.split(b, split_points, axis=1)

    dist = 0.0
    for k, ck in enumerate(channels):
        x = feats1[k]
        y = feats2[k]
        n, c, h, w = x.shape
        assert c == ck
        # Native-dtype pass-through: no f32 up-cast before the kernel.
        x2 = x.reshape(n, c, h * w)
        y2 = y.reshape(n, c, h * w)
        alpha_k = a_splits[k].reshape(c, 1).astype(jnp.float32)
        beta_k = b_splits[k].reshape(c, 1).astype(jnp.float32)
        dist = dist + _dists_scale(x2, y2, alpha_k, beta_k, hw_tile=hw_tile)

    # torch.squeeze(dist1 + dist2): (N,1,1,1) -> (N,) ; return 1 - that.
    return 1.0 - dist


def _reference_forward(feats1, feats2, alpha, beta, channels):
    """Pure-JAX reference (mirrors the PyTorch code) for validation."""
    a = jax.nn.sigmoid(alpha)
    b = jax.nn.sigmoid(beta)
    w_sum = jnp.sum(a) + jnp.sum(b)
    a = a / w_sum
    b = b / w_sum
    split_points = list(np.cumsum(channels)[:-1])
    a_splits = jnp.split(a, split_points, axis=1)
    b_splits = jnp.split(b, split_points, axis=1)
    dist1 = 0.0
    dist2 = 0.0
    for k in range(len(channels)):
        x = feats1[k].astype(jnp.float32)
        y = feats2[k].astype(jnp.float32)
        x_mean = x.mean(axis=(2, 3), keepdims=True)
        y_mean = y.mean(axis=(2, 3), keepdims=True)
        s1 = (2 * x_mean * y_mean + C1) / (x_mean**2 + y_mean**2 + C1)
        dist1 = dist1 + (a_splits[k] * s1).sum(axis=1, keepdims=True)
        x_var = ((x - x_mean) ** 2).mean(axis=(2, 3), keepdims=True)
        y_var = ((y - y_mean) ** 2).mean(axis=(2, 3), keepdims=True)
        xy_cov = (x * y).mean(axis=(2, 3), keepdims=True) - x_mean * y_mean
        s2 = (2 * xy_cov + C2) / (x_var + y_var + C2)
        dist2 = dist2 + (b_splits[k] * s2).sum(axis=1, keepdims=True)
    return 1.0 - jnp.squeeze(dist1 + dist2)


if __name__ == "__main__":
    key = jax.random.PRNGKey(0)
    keys = jax.random.split(key, 8)

    # Small multi-scale backbone features (NCHW). Third scale (18x18) is not a
    # multiple of the forced 128-wide HW tile, exercising the tail-mask path.
    backbone_channels = (4, 8, 8)
    N = 2
    shapes = [(N, 4, 16, 16), (N, 8, 8, 8), (N, 8, 18, 18)]
    feats1 = [jax.random.normal(keys[i], s, dtype=jnp.float32)
              for i, s in enumerate(shapes)]
    feats2 = [jax.random.normal(keys[3 + i], s, dtype=jnp.float32)
              for i, s in enumerate(shapes)]

    # Parameters: module __init__ uses zeros of shape (1, sum(channels), 1, 1).
    # Use deterministic random values so the weighting is non-trivial.
    total_c = sum(backbone_channels)
    alpha = 0.1 * jax.random.normal(keys[6], (1, total_c, 1, 1), dtype=jnp.float32)
    beta = 0.1 * jax.random.normal(keys[7], (1, total_c, 1, 1), dtype=jnp.float32)

    ref = _reference_forward(feats1, feats2, alpha, beta, backbone_channels)

    # 1) default auto tiling (full-HW blocks at these small sizes).
    out = jax.block_until_ready(
        dists_forward(feats1, feats2, alpha, beta, backbone_channels))
    np.testing.assert_allclose(np.asarray(out), np.asarray(ref),
                               rtol=1e-4, atol=1e-5)

    # 2) forced 128-wide HW tile -> multi-step streaming accumulation
    #    (and ragged-tail masking on the 18x18 scale).
    out_tiled = jax.block_until_ready(
        dists_forward(feats1, feats2, alpha, beta, backbone_channels, hw_tile=128))
    np.testing.assert_allclose(np.asarray(out_tiled), np.asarray(ref),
                               rtol=1e-4, atol=1e-5)

    # 3) bf16 feature pass-through (halved HBM traffic; f32 math in-kernel).
    feats1_bf = [f.astype(jnp.bfloat16) for f in feats1]
    feats2_bf = [f.astype(jnp.bfloat16) for f in feats2]
    ref_bf = _reference_forward(feats1_bf, feats2_bf, alpha, beta, backbone_channels)
    out_bf = jax.block_until_ready(
        dists_forward(feats1_bf, feats2_bf, alpha, beta, backbone_channels))
    np.testing.assert_allclose(np.asarray(out_bf), np.asarray(ref_bf),
                               rtol=1e-4, atol=1e-4)

    print("KERNEL_OK")
</pallas_src>

<mosaic_0001>
module attributes {stable_mosaic.version = 11 : i64} {
  func.func @_dists_scale_kernel(%arg0: i32, %arg1: i32, %arg2: memref<1x4x256xf32, #tpu.memory_space<vmem>>, %arg3: memref<1x4x256xf32, #tpu.memory_space<vmem>>, %arg4: memref<4x1xf32, #tpu.memory_space<vmem>>, %arg5: memref<4x1xf32, #tpu.memory_space<vmem>>, %arg6: memref<1x1x1xf32, #tpu.memory_space<vmem>>, %arg7: memref<1x4x1xf32, #tpu.memory_space<vmem>>, %arg8: memref<1x4x1xf32, #tpu.memory_space<vmem>>, %arg9: memref<1x4x1xf32, #tpu.memory_space<vmem>>, %arg10: memref<1x4x1xf32, #tpu.memory_space<vmem>>, %arg11: memref<1x4x1xf32, #tpu.memory_space<vmem>>) attributes {dimension_semantics = [#tpu.dimension_semantics<parallel>, #tpu.dimension_semantics<arbitrary>], iteration_bounds = array<i64: 2, 1>, scalar_prefetch = 0 : i64, scratch_operands = 5 : i64, tpu.core_type = #tpu.core_type<tc>, window_params = [{transform_indices = @transform_0, window_bounds = array<i64: 1, 4, 256>}, {transform_indices = @transform_1, window_bounds = array<i64: 1, 4, 256>}, {pipeline_mode = #tpu.pipeline_mode<synchronous>, transform_indices = @transform_2, window_bounds = array<i64: 4, 1>}, {pipeline_mode = #tpu.pipeline_mode<synchronous>, transform_indices = @transform_3, window_bounds = array<i64: 4, 1>}, {transform_indices = @transform_4, window_bounds = array<i64: 1, 1, 1>}]} {
    %c0 = arith.constant 0 : index
    %c0_0 = arith.constant 0 : index
    %c0_1 = arith.constant 0 : index
    %0 = vector.load %arg2[%c0, %c0_0, %c0_1] : memref<1x4x256xf32, #tpu.memory_space<vmem>>, vector<1x4x256xf32>
    %c0_2 = arith.constant 0 : index
    %c0_3 = arith.constant 0 : index
    %c0_4 = arith.constant 0 : index
    %1 = vector.load %arg3[%c0_2, %c0_3, %c0_4] : memref<1x4x256xf32, #tpu.memory_space<vmem>>, vector<1x4x256xf32>
    %cst = arith.constant dense<0.000000e+00> : vector<1x4xf32>
    %2 = vector.multi_reduction <add>, %0, %cst [2] : vector<1x4x256xf32> to vector<1x4xf32>
    %3 = vector.shape_cast %2 : vector<1x4xf32> to vector<1x4x1xf32>
    %cst_5 = arith.constant dense<0.000000e+00> : vector<1x4xf32>
    %4 = vector.multi_reduction <add>, %1, %cst_5 [2] : vector<1x4x256xf32> to vector<1x4xf32>
    %5 = vector.shape_cast %4 : vector<1x4xf32> to vector<1x4x1xf32>
    %6 = arith.mulf %0, %0 : vector<1x4x256xf32>
    %cst_6 = arith.constant dense<0.000000e+00> : vector<1x4xf32>
    %7 = vector.multi_reduction <add>, %6, %cst_6 [2] : vector<1x4x256xf32> to vector<1x4xf32>
    %8 = vector.shape_cast %7 : vector<1x4xf32> to vector<1x4x1xf32>
    %9 = arith.mulf %1, %1 : vector<1x4x256xf32>
    %cst_7 = arith.constant dense<0.000000e+00> : vector<1x4xf32>
    %10 = vector.multi_reduction <add>, %9, %cst_7 [2] : vector<1x4x256xf32> to vector<1x4xf32>
    %11 = vector.shape_cast %10 : vector<1x4xf32> to vector<1x4x1xf32>
    %12 = arith.mulf %0, %1 : vector<1x4x256xf32>
    %cst_8 = arith.constant dense<0.000000e+00> : vector<1x4xf32>
    %13 = vector.multi_reduction <add>, %12, %cst_8 [2] : vector<1x4x256xf32> to vector<1x4xf32>
    %14 = vector.shape_cast %13 : vector<1x4xf32> to vector<1x4x1xf32>
    %c0_i32 = arith.constant 0 : i32
    %15 = arith.cmpi eq, %arg1, %c0_i32 : i32
    %16 = arith.extui %15 : i1 to i32
    %c0_i32_9 = arith.constant 0 : i32
    %17 = arith.cmpi ne, %16, %c0_i32_9 : i32
    scf.if %17 {
      %c0_14 = arith.constant 0 : index
      %c0_15 = arith.constant 0 : index
      %c0_16 = arith.constant 0 : index
      %24 = vector.load %arg7[%c0_14, %c0_15, %c0_16] : memref<1x4x1xf32, #tpu.memory_space<vmem>>, vector<1x4x1xf32>
      tpu.vector_store %arg7[%c0_14, %c0_15, %c0_16], %3 {strides = array<i32>} : memref<1x4x1xf32, #tpu.memory_space<vmem>>, vector<1x4x1xf32>,
      %c0_17 = arith.constant 0 : index
      %c0_18 = arith.constant 0 : index
      %c0_19 = arith.constant 0 : index
      %25 = vector.load %arg8[%c0_17, %c0_18, %c0_19] : memref<1x4x1xf32, #tpu.memory_space<vmem>>, vector<1x4x1xf32>
      tpu.vector_store %arg8[%c0_17, %c0_18, %c0_19], %5 {strides = array<i32>} : memref<1x4x1xf32, #tpu.memory_space<vmem>>, vector<1x4x1xf32>,
      %c0_20 = arith.constant 0 : index
      %c0_21 = arith.constant 0 : index
      %c0_22 = arith.constant 0 : index
      %26 = vector.load %arg9[%c0_20, %c0_21, %c0_22] : memref<1x4x1xf32, #tpu.memory_space<vmem>>, vector<1x4x1xf32>
      tpu.vector_store %arg9[%c0_20, %c0_21, %c0_22], %8 {strides = array<i32>} : memref<1x4x1xf32, #tpu.memory_space<vmem>>, vector<1x4x1xf32>,
      %c0_23 = arith.constant 0 : index
      %c0_24 = arith.constant 0 : index
      %c0_25 = arith.constant 0 : index
      %27 = vector.load %arg10[%c0_23, %c0_24, %c0_25] : memref<1x4x1xf32, #tpu.memory_space<vmem>>, vector<1x4x1xf32>
      tpu.vector_store %arg10[%c0_23, %c0_24, %c0_25], %11 {strides = array<i32>} : memref<1x4x1xf32, #tpu.memory_space<vmem>>, vector<1x4x1xf32>,
      %c0_26 = arith.constant 0 : index
      %c0_27 = arith.constant 0 : index
      %c0_28 = arith.constant 0 : index
      %28 = vector.load %arg11[%c0_26, %c0_27, %c0_28] : memref<1x4x1xf32, #tpu.memory_space<vmem>>, vector<1x4x1xf32>
      tpu.vector_store %arg11[%c0_26, %c0_27, %c0_28], %14 {strides = array<i32>} : memref<1x4x1xf32, #tpu.memory_space<vmem>>, vector<1x4x1xf32>,
    } else {
    }
    %c0_i32_10 = arith.constant 0 : i32
    %18 = arith.cmpi sgt, %arg1, %c0_i32_10 : i32
    %19 = arith.extui %18 : i1 to i32
    %c0_i32_11 = arith.constant 0 : i32
    %20 = arith.cmpi ne, %19, %c0_i32_11 : i32
    scf.if %20 {
      %c0_14 = arith.constant 0 : index
      %c0_15 = arith.constant 0 : index
      %c0_16 = arith.constant 0 : index
      %24 = vector.load %arg7[%c0_14, %c0_15, %c0_16] : memref<1x4x1xf32, #tpu.memory_space<vmem>>, vector<1x4x1xf32>
      %25 = arith.addf %24, %3 : vector<1x4x1xf32>
      %c0_17 = arith.constant 0 : index
      %c0_18 = arith.constant 0 : index
      %c0_19 = arith.constant 0 : index
      %26 = vector.load %arg7[%c0_17, %c0_18, %c0_19] : memref<1x4x1xf32, #tpu.memory_space<vmem>>, vector<1x4x1xf32>
      tpu.vector_store %arg7[%c0_17, %c0_18, %c0_19], %25 {strides = array<i32>} : memref<1x4x1xf32, #tpu.memory_space<vmem>>, vector<1x4x1xf32>,
      %c0_20 = arith.constant 0 : index
      %c0_21 = arith.constant 0 : index
      %c0_22 = arith.constant 0 : index
      %27 = vector.load %arg8[%c0_20, %c0_21, %c0_22] : memref<1x4x1xf32, #tpu.memory_space<vmem>>, vector<1x4x1xf32>
      %28 = arith.addf %27, %5 : vector<1x4x1xf32>
      %c0_23 = arith.constant 0 : index
      %c0_24 = arith.constant 0 : index
      %c0_25 = arith.constant 0 : index
      %29 = vector.load %arg8[%c0_23, %c0_24, %c0_25] : memref<1x4x1xf32, #tpu.memory_space<vmem>>, vector<1x4x1xf32>
      tpu.vector_store %arg8[%c0_23, %c0_24, %c0_25], %28 {strides = array<i32>} : memref<1x4x1xf32, #tpu.memory_space<vmem>>, vector<1x4x1xf32>,
      %c0_26 = arith.constant 0 : index
      %c0_27 = arith.constant 0 : index
      %c0_28 = arith.constant 0 : index
      %30 = vector.load %arg9[%c0_26, %c0_27, %c0_28] : memref<1x4x1xf32, #tpu.memory_space<vmem>>, vector<1x4x1xf32>
      %31 = arith.addf %30, %8 : vector<1x4x1xf32>
      %c0_29 = arith.constant 0 : index
      %c0_30 = arith.constant 0 : index
      %c0_31 = arith.constant 0 : index
      %32 = vector.load %arg9[%c0_29, %c0_30, %c0_31] : memref<1x4x1xf32, #tpu.memory_space<vmem>>, vector<1x4x1xf32>
      tpu.vector_store %arg9[%c0_29, %c0_30, %c0_31], %31 {strides = array<i32>} : memref<1x4x1xf32, #tpu.memory_space<vmem>>, vector<1x4x1xf32>,
      %c0_32 = arith.constant 0 : index
      %c0_33 = arith.constant 0 : index
      %c0_34 = arith.constant 0 : index
      %33 = vector.load %arg10[%c0_32, %c0_33, %c0_34] : memref<1x4x1xf32, #tpu.memory_space<vmem>>, vector<1x4x1xf32>
      %34 = arith.addf %33, %11 : vector<1x4x1xf32>
      %c0_35 = arith.constant 0 : index
      %c0_36 = arith.constant 0 : index
      %c0_37 = arith.constant 0 : index
      %35 = vector.load %arg10[%c0_35, %c0_36, %c0_37] : memref<1x4x1xf32, #tpu.memory_space<vmem>>, vector<1x4x1xf32>
      tpu.vector_store %arg10[%c0_35, %c0_36, %c0_37], %34 {strides = array<i32>} : memref<1x4x1xf32, #tpu.memory_space<vmem>>, vector<1x4x1xf32>,
      %c0_38 = arith.constant 0 : index
      %c0_39 = arith.constant 0 : index
      %c0_40 = arith.constant 0 : index
      %36 = vector.load %arg11[%c0_38, %c0_39, %c0_40] : memref<1x4x1xf32, #tpu.memory_space<vmem>>, vector<1x4x1xf32>
      %37 = arith.addf %36, %14 : vector<1x4x1xf32>
      %c0_41 = arith.constant 0 : index
      %c0_42 = arith.constant 0 : index
      %c0_43 = arith.constant 0 : index
      %38 = vector.load %arg11[%c0_41, %c0_42, %c0_43] : memref<1x4x1xf32, #tpu.memory_space<vmem>>, vector<1x4x1xf32>
      tpu.vector_store %arg11[%c0_41, %c0_42, %c0_43], %37 {strides = array<i32>} : memref<1x4x1xf32, #tpu.memory_space<vmem>>, vector<1x4x1xf32>,
    } else {
    }
    %c0_i32_12 = arith.constant 0 : i32
    %21 = arith.cmpi eq, %arg1, %c0_i32_12 : i32
    %22 = arith.extui %21 : i1 to i32
    %c0_i32_13 = arith.constant 0 : i32
    %23 = arith.cmpi ne, %22, %c0_i32_13 : i32
    scf.if %23 {
      %c0_14 = arith.constant 0 : index
      %c0_15 = arith.constant 0 : index
      %c0_16 = arith.constant 0 : index
      %24 = vector.load %arg7[%c0_14, %c0_15, %c0_16] : memref<1x4x1xf32, #tpu.memory_space<vmem>>, vector<1x4x1xf32>
      %cst_17 = arith.constant 3.906250e-03 : f32
      %25 = vector.broadcast %cst_17 : f32 to vector<1x4x1xf32>
      %26 = arith.mulf %24, %25 : vector<1x4x1xf32>
      %c0_18 = arith.constant 0 : index
      %c0_19 = arith.constant 0 : index
      %c0_20 = arith.constant 0 : index
      %27 = vector.load %arg8[%c0_18, %c0_19, %c0_20] : memref<1x4x1xf32, #tpu.memory_space<vmem>>, vector<1x4x1xf32>
      %cst_21 = arith.constant 3.906250e-03 : f32
      %28 = vector.broadcast %cst_21 : f32 to vector<1x4x1xf32>
      %29 = arith.mulf %27, %28 : vector<1x4x1xf32>
      %c0_22 = arith.constant 0 : index
      %c0_23 = arith.constant 0 : index
      %c0_24 = arith.constant 0 : index
      %30 = vector.load %arg9[%c0_22, %c0_23, %c0_24] : memref<1x4x1xf32, #tpu.memory_space<vmem>>, vector<1x4x1xf32>
      %cst_25 = arith.constant 3.906250e-03 : f32
      %31 = vector.broadcast %cst_25 : f32 to vector<1x4x1xf32>
      %32 = arith.mulf %30, %31 : vector<1x4x1xf32>
      %33 = arith.mulf %26, %26 : vector<1x4x1xf32>
      %34 = arith.subf %32, %33 : vector<1x4x1xf32>
      %c0_26 = arith.constant 0 : index
      %c0_27 = arith.constant 0 : index
      %c0_28 = arith.constant 0 : index
      %35 = vector.load %arg10[%c0_26, %c0_27, %c0_28] : memref<1x4x1xf32, #tpu.memory_space<vmem>>, vector<1x4x1xf32>
      %cst_29 = arith.constant 3.906250e-03 : f32
      %36 = vector.broadcast %cst_29 : f32 to vector<1x4x1xf32>
      %37 = arith.mulf %35, %36 : vector<1x4x1xf32>
      %38 = arith.mulf %29, %29 : vector<1x4x1xf32>
      %39 = arith.subf %37, %38 : vector<1x4x1xf32>
      %c0_30 = arith.constant 0 : index
      %c0_31 = arith.constant 0 : index
      %c0_32 = arith.constant 0 : index
      %40 = vector.load %arg11[%c0_30, %c0_31, %c0_32] : memref<1x4x1xf32, #tpu.memory_space<vmem>>, vector<1x4x1xf32>
      %cst_33 = arith.constant 3.906250e-03 : f32
      %41 = vector.broadcast %cst_33 : f32 to vector<1x4x1xf32>
      %42 = arith.mulf %40, %41 : vector<1x4x1xf32>
      %43 = arith.mulf %26, %29 : vector<1x4x1xf32>
      %44 = arith.subf %42, %43 : vector<1x4x1xf32>
      %cst_34 = arith.constant 2.000000e+00 : f32
      %45 = vector.broadcast %cst_34 : f32 to vector<1x4x1xf32>
      %46 = arith.mulf %45, %26 : vector<1x4x1xf32>
      %47 = arith.mulf %46, %29 : vector<1x4x1xf32>
      %cst_35 = arith.constant 9.99999997E-7 : f32
      %48 = vector.broadcast %cst_35 : f32 to vector<1x4x1xf32>
      %49 = arith.addf %47, %48 : vector<1x4x1xf32>
      %50 = arith.mulf %26, %26 : vector<1x4x1xf32>
      %51 = arith.mulf %29, %29 : vector<1x4x1xf32>
      %52 = arith.addf %50, %51 : vector<1x4x1xf32>
      %cst_36 = arith.constant 9.99999997E-7 : f32
      %53 = vector.broadcast %cst_36 : f32 to vector<1x4x1xf32>
      %54 = arith.addf %52, %53 : vector<1x4x1xf32>
      %55 = arith.divf %49, %54 : vector<1x4x1xf32>
      %cst_37 = arith.constant 2.000000e+00 : f32
      %56 = vector.broadcast %cst_37 : f32 to vector<1x4x1xf32>
      %57 = arith.mulf %56, %44 : vector<1x4x1xf32>
      %cst_38 = arith.constant 9.99999997E-7 : f32
      %58 = vector.broadcast %cst_38 : f32 to vector<1x4x1xf32>
      %59 = arith.addf %57, %58 : vector<1x4x1xf32>
      %60 = arith.addf %34, %39 : vector<1x4x1xf32>
      %cst_39 = arith.constant 9.99999997E-7 : f32
      %61 = vector.broadcast %cst_39 : f32 to vector<1x4x1xf32>
      %62 = arith.addf %60, %61 : vector<1x4x1xf32>
      %63 = arith.divf %59, %62 : vector<1x4x1xf32>
      %c0_40 = arith.constant 0 : index
      %c0_41 = arith.constant 0 : index
      %64 = vector.load %arg4[%c0_40, %c0_41] : memref<4x1xf32, #tpu.memory_space<vmem>>, vector<4x1xf32>
      %65 = vector.shape_cast %64 : vector<4x1xf32> to vector<1x4x1xf32>
      %66 = arith.mulf %65, %55 : vector<1x4x1xf32>
      %cst_42 = arith.constant dense<0.000000e+00> : vector<1x1xf32>
      %67 = vector.multi_reduction <add>, %66, %cst_42 [1] : vector<1x4x1xf32> to vector<1x1xf32>
      %68 = vector.shape_cast %67 : vector<1x1xf32> to vector<1x1x1xf32>
      %c0_43 = arith.constant 0 : index
      %c0_44 = arith.constant 0 : index
      %69 = vector.load %arg5[%c0_43, %c0_44] : memref<4x1xf32, #tpu.memory_space<vmem>>, vector<4x1xf32>
      %70 = vector.shape_cast %69 : vector<4x1xf32> to vector<1x4x1xf32>
      %71 = arith.mulf %70, %63 : vector<1x4x1xf32>
      %cst_45 = arith.constant dense<0.000000e+00> : vector<1x1xf32>
      %72 = vector.multi_reduction <add>, %71, %cst_45 [1] : vector<1x4x1xf32> to vector<1x1xf32>
      %73 = vector.shape_cast %72 : vector<1x1xf32> to vector<1x1x1xf32>
      %74 = arith.addf %68, %73 : vector<1x1x1xf32>
      %c0_46 = arith.constant 0 : index
      %c0_47 = arith.constant 0 : index
      %c0_48 = arith.constant 0 : index
      %75 = vector.load %arg6[%c0_46, %c0_47, %c0_48] : memref<1x1x1xf32, #tpu.memory_space<vmem>>, vector<1x1x1xf32>
      tpu.vector_store %arg6[%c0_46, %c0_47, %c0_48], %74 {strides = array<i32>} : memref<1x1x1xf32, #tpu.memory_space<vmem>>, vector<1x1x1xf32>,
    } else {
    }
    return
  }
  func.func @transform_0(%arg0: i32, %arg1: i32) -> (i32, i32, i32) {
    %c0_i32 = arith.constant 0 : i32
    %c0_i32_0 = arith.constant 0 : i32
    return %arg0, %c0_i32, %arg1 : i32, i32, i32
  }
  func.func @transform_1(%arg0: i32, %arg1: i32) -> (i32, i32, i32) {
    %c0_i32 = arith.constant 0 : i32
    %c0_i32_0 = arith.constant 0 : i32
    return %arg0, %c0_i32, %arg1 : i32, i32, i32
  }
  func.func @transform_2(%arg0: i32, %arg1: i32) -> (i32, i32) {
    %c0_i32 = arith.constant 0 : i32
    %c0_i32_0 = arith.constant 0 : i32
    %c0_i32_1 = arith.constant 0 : i32
    return %c0_i32, %c0_i32_0 : i32, i32
  }
  func.func @transform_3(%arg0: i32, %arg1: i32) -> (i32, i32) {
    %c0_i32 = arith.constant 0 : i32
    %c0_i32_0 = arith.constant 0 : i32
    %c0_i32_1 = arith.constant 0 : i32
    return %c0_i32, %c0_i32_0 : i32, i32
  }
  func.func @transform_4(%arg0: i32, %arg1: i32) -> (i32, i32, i32) {
    %c0_i32 = arith.constant 0 : i32
    %c0_i32_0 = arith.constant 0 : i32
    %c0_i32_1 = arith.constant 0 : i32
    return %arg0, %c0_i32, %c0_i32_0 : i32, i32, i32
  }
}

</mosaic_0001>

<llo_original>
// kernel: tpu_custom_call.1
$region0: #{tpu_custom_call.1}
  #allocation0 [shape = 'u32[]', space=smem, size = 0x4, offset = 0x4, fixed_abs, tag = 'smem constant byte address 0x4 - core index']
  #allocation1 [shape = 'u32[144,128]{1,0:T(1,128)}', space=vmem, size = 0x12000, scoped, tag = 'internal scratch']
  #allocation2 [shape = 'f32[1,4,1]{2,1,0:T(4,128)}', space=vmem, size = 0x800, scoped, tag = 'scratch operand']
  #allocation3 [shape = 'f32[1,4,1]{2,1,0:T(4,128)}', space=vmem, size = 0x800, scoped, tag = 'scratch operand']
  #allocation4 [shape = 'f32[1,4,1]{2,1,0:T(4,128)}', space=vmem, size = 0x800, scoped, tag = 'scratch operand']
  #allocation5 [shape = 'f32[1,4,1]{2,1,0:T(4,128)}', space=vmem, size = 0x800, scoped, tag = 'scratch operand']
  #allocation6 [shape = 'f32[1,4,1]{2,1,0:T(4,128)}', space=vmem, size = 0x800, scoped, tag = 'scratch operand']
  %s0 = inlined_call_operand.hbm [shape: f32[2,4,256], index: 0, kind: input, shape index: {}]
  %s1 = inlined_call_operand.hbm [shape: f32[2,4,256], index: 1, kind: input, shape index: {}]
  %s2 = inlined_call_operand.vmem [shape: f32[4,1], index: 2, kind: input, shape index: {}]
  %s3 = inlined_call_operand.vmem [shape: f32[4,1], index: 3, kind: input, shape index: {}]
  %s4 = inlined_call_operand.vmem [shape: f32[2,1,1], index: 4, kind: output, shape index: {}]
  %s5 = sld [smem:[#allocation0]]
  $region69: #{tpu_custom_call.1} parent=0
    _
  %s7 = ssub.s32 1, %s5
  %s8 = scalar_select 0, %s7, %s5
  $region1: #{tpu_custom_call.1} parent=0
    #allocation7 [shape = 'u8[8192]{0}', space=vmem, size = 0x2000, scoped, tag = 'input window, operand 0']
    #allocation8 [shape = 's32[2]{0}', space=sflag, size = 0x8, scoped, tag = 'scoped memory for tpu_custom_call.1']
    #allocation9 [shape = 'u8[8192]{0}', space=vmem, size = 0x2000, scoped, tag = 'input window, operand 1']
    #allocation10 [shape = 's32[2]{0}', space=sflag, size = 0x8, scoped, tag = 'scoped memory for tpu_custom_call.1']
    %9 = vsyncpa [#allocation8], 0
    %s10 = scalar_lea.sflag [#allocation8], 1
    %11 = vsyncpa %s10, 0
    %12 = vsyncpa [#allocation10], 0
    %s13 = scalar_lea.sflag [#allocation10], 1
    %14 = vsyncpa %s13, 0
    loop: start=0, step=1, limit=4
    $region2: #{tpu_custom_call.1} parent=1 // loop_pre_header
      _
    $region3: #{tpu_custom_call.1} parent=1 // loop_header
      %s16 = sphi 0, %s20
      %p17 = scmp.ge.s32.totalorder %s16, 4
      %s23 = sphi 0, %s35
      %s24 = sphi 0, %s31
      %s25 = sphi 0, %s23
      %s26 = sphi 0, %s24
      %s27 = sphi 0, %s25
      %s28 = sphi 0, %s26
      %s40 = sphi 0, %s42
      %s43 = sphi 0, %s40
      %s44 = sphi 0, %s43
      %s60 = sphi 0, %s44
      %s68 = sphi 0, %s70
      %s71 = sphi 0, %s68
      %s72 = sphi 0, %s71
      %s88 = sphi 0, %s72
      %s92 = sphi 0, %s92
      %s94 = sphi 0, %s92
      %s95 = sphi 0, %s94
      %s109 = sphi 0, %s95
      %s113 = sphi 0, %s113
      %s115 = sphi 0, %s113
      %s116 = sphi 0, %s115
      %s130 = sphi 0, %s116
      %s136 = sphi 0, %s138
      %s139 = sphi 0, %s136
      %s140 = sphi 0, %s139
      %s156 = sphi 0, %s140
    $region4: #{tpu_custom_call.1} parent=1 // loop_header_branch
      %19 = sbr.rel (%p17) target = $region8
    $region5: #{tpu_custom_call.1} parent=1 // loop_body
      %s21 = ssub.s32 %s16, 1
      %s22 = ssub.s32 %s16, 2
      %s29 = sadd.s32 1, %s24
      %p30 = scmp.ge.s32.totalorder %s29, 1
      %s31 = scalar_select %p30, 0, %s29
      %s32 = sadd.s32 1, %s23
      %s33 = scalar_select %p30, %s32, %s23
      %p34 = scmp.ge.s32.totalorder %s33, 2
      %s35 = scalar_select %p34, 0, %s33
      %s36 = ssub.s32 %s23, %s35
      %s37 = ssub.s32 %s24, %s31
      %s38 = sor.u32 %s36, %s37
      %p39 = scmp.eq.s32.totalorder %s38, 0
      %s41 = sadd.s32 %s40, 1
      %s42 = scalar_select %p39, %s40, %s41
      %p45 = pneg %p39
      %p46 = scmp.eq.s32.totalorder %s16, 1
      %p47 = por %p45, %p46
      %p48 = scmp.ne.s32.totalorder %s40, %s43
      %p49 = scmp.eq.s32.totalorder %s16, 0
      %p50 = por %p48, %p49
      %p51 = scmp.ne.s32.totalorder %s40, %s43
      %p52 = scmp.eq.s32.totalorder %s21, 1
      %p53 = por %p51, %p52
      %p54 = scmp.ne.s32.totalorder %s43, %s44
      %p55 = scmp.eq.s32.totalorder %s21, 0
      %p56 = por %p54, %p55
      %p57 = scmp.ne.s32.totalorder %s43, %s44
      %p58 = scmp.eq.s32.totalorder %s22, 1
      %p59 = por %p57, %p58
      %p61 = scmp.ne.s32.totalorder %s44, %s60
      %p62 = scmp.eq.s32.totalorder %s22, 0
      %p63 = por %p61, %p62
      %s64 = ssub.s32 %s23, %s35
      %s65 = ssub.s32 %s24, %s31
      %s66 = sor.u32 %s64, %s65
      %p67 = scmp.eq.s32.totalorder %s66, 0
      %s69 = sadd.s32 %s68, 1
      %s70 = scalar_select %p67, %s68, %s69
      %p73 = pneg %p67
      %p74 = scmp.eq.s32.totalorder %s16, 1
      %p75 = por %p73, %p74
      %p76 = scmp.ne.s32.totalorder %s68, %s71
      %p77 = scmp.eq.s32.totalorder %s16, 0
      %p78 = por %p76, %p77
      %p79 = scmp.ne.s32.totalorder %s68, %s71
      %p80 = scmp.eq.s32.totalorder %s21, 1
      %p81 = por %p79, %p80
      %p82 = scmp.ne.s32.totalorder %s71, %s72
      %p83 = scmp.eq.s32.totalorder %s21, 0
      %p84 = por %p82, %p83
      %p85 = scmp.ne.s32.totalorder %s71, %s72
      %p86 = scmp.eq.s32.totalorder %s22, 1
      %p87 = por %p85, %p86
      %p89 = scmp.ne.s32.totalorder %s72, %s88
      %p90 = scmp.eq.s32.totalorder %s22, 0
      %p91 = por %p89, %p90
      %s93 = sadd.s32 %s92, 1
      %p96 = scmp.eq.s32.totalorder %s16, 1
      %p97 = scmp.ne.s32.totalorder %s92, %s94
      %p98 = scmp.eq.s32.totalorder %s16, 0
      %p99 = por %p97, %p98
      %p100 = scmp.ne.s32.totalorder %s92, %s94
      %p101 = scmp.eq.s32.totalorder %s21, 1
      %p102 = por %p100, %p101
      %p103 = scmp.ne.s32.totalorder %s94, %s95
      %p104 = scmp.eq.s32.totalorder %s21, 0
      %p105 = por %p103, %p104
      %p106 = scmp.ne.s32.totalorder %s94, %s95
      %p107 = scmp.eq.s32.totalorder %s22, 1
      %p108 = por %p106, %p107
      %p110 = scmp.ne.s32.totalorder %s95, %s109
      %p111 = scmp.eq.s32.totalorder %s22, 0
      %p112 = por %p110, %p111
      %s114 = sadd.s32 %s113, 1
      %p117 = scmp.eq.s32.totalorder %s16, 1
      %p118 = scmp.ne.s32.totalorder %s113, %s115
      %p119 = scmp.eq.s32.totalorder %s16, 0
      %p120 = por %p118, %p119
      %p121 = scmp.ne.s32.totalorder %s113, %s115
      %p122 = scmp.eq.s32.totalorder %s21, 1
      %p123 = por %p121, %p122
      %p124 = scmp.ne.s32.totalorder %s115, %s116
      %p125 = scmp.eq.s32.totalorder %s21, 0
      %p126 = por %p124, %p125
      %p127 = scmp.ne.s32.totalorder %s115, %s116
      %p128 = scmp.eq.s32.totalorder %s22, 1
      %p129 = por %p127, %p128
      %p131 = scmp.ne.s32.totalorder %s116, %s130
      %p132 = scmp.eq.s32.totalorder %s22, 0
      %p133 = por %p131, %p132
      %s134 = ssub.s32 %s23, %s35
      %p135 = scmp.eq.s32.totalorder %s134, 0
      %s137 = sadd.s32 %s136, 1
      %s138 = scalar_select %p135, %s136, %s137
      %p141 = pneg %p135
      %p142 = scmp.eq.s32.totalorder %s16, 1
      %p143 = por %p141, %p142
      %p144 = scmp.ne.s32.totalorder %s136, %s139
      %p145 = scmp.eq.s32.totalorder %s16, 0
      %p146 = por %p144, %p145
      %p147 = scmp.ne.s32.totalorder %s136, %s139
      %p148 = scmp.eq.s32.totalorder %s21, 1
      %p149 = por %p147, %p148
      %p150 = scmp.ne.s32.totalorder %s139, %s140
      %p151 = scmp.eq.s32.totalorder %s21, 0
      %p152 = por %p150, %p151
      %p153 = scmp.ne.s32.totalorder %s139, %s140
      %p154 = scmp.eq.s32.totalorder %s22, 1
      %p155 = por %p153, %p154
      %p157 = scmp.ne.s32.totalorder %s140, %s156
      %p158 = scmp.eq.s32.totalorder %s22, 0
      %p159 = por %p157, %p158
      %p160 = scmp.le.s32.totalorder 1, %s16
      %p161 = scmp.lt.s32.totalorder %s16, 3
      %p162 = pnand %p160, %p161
      %p163 = pneg %p162
      // Predicated region
      $region9: #{tpu_custom_call.1} parent=5 // pred_check
        _
      $region10: #{tpu_custom_call.1} parent=5 // pred_check_branch
        %165 = sbr.rel (%p162) target = $region12
      $region11: #{tpu_custom_call.1} parent=5 // pred_region
        %s166 = ssub.s32 %s16, 1
        // Predicated region
        $region13: #{tpu_custom_call.1} parent=11 // pred_check
          %p167 = pneg %p105
        $region14: #{tpu_custom_call.1} parent=11 // pred_check_branch
          %169 = sbr.rel (%p167) target = $region16
        $region15: #{tpu_custom_call.1} parent=11 // pred_region
          _
        $region16: #{tpu_custom_call.1} parent=11 // pred_fallthru
          _
        // Predicated region
        $region17: #{tpu_custom_call.1} parent=11 // pred_check
          %p170 = pneg %p126
        $region18: #{tpu_custom_call.1} parent=11 // pred_check_branch
          %172 = sbr.rel (%p170) target = $region20
        $region19: #{tpu_custom_call.1} parent=11 // pred_region
          _
        $region20: #{tpu_custom_call.1} parent=11 // pred_fallthru
          _
      $region12: #{tpu_custom_call.1} parent=5 // pred_fallthru
        _
      %p173 = scmp.lt.s32.totalorder %s16, 2
      // Predicated region
      $region21: #{tpu_custom_call.1} parent=5 // pred_check
        %p174 = pneg %p173
      $region22: #{tpu_custom_call.1} parent=5 // pred_check_branch
        %176 = sbr.rel (%p174) target = $region24
      $region23: #{tpu_custom_call.1} parent=5 // pred_region
        // Predicated region
        $region25: #{tpu_custom_call.1} parent=23 // pred_check
          %p177 = pneg %p50
        $region26: #{tpu_custom_call.1} parent=23 // pred_check_branch
          %179 = sbr.rel (%p177) target = $region28
        $region27: #{tpu_custom_call.1} parent=23 // pred_region
          %s180 = sand.u32 %s40, 1
          %s181 = scalar_lea.sflag [#allocation8], %s180
          %s182 = sand.u32 %s40, 1
          %s183 = smul.addr %s182, 8
          %s184 = scalar_lea.vmem [#allocation7], %s183
          %s185 = smul.u32 2, %s24
          %s187 = ssub.s32 128, 128
          %188 = vsyncadd %s181, %s187
          %s189 = smul.addr %s23, 2
          %s190 = sadd.s32 %s185, %s189
          %s191 = smul.addr %s190, 64
          %s192 = scalar_lea.hbm %s0, %s191
          %s194 = sshll.u32 %s184, 4
          %s195 = int_to_ptr.vmem [resolvable:$true] %s194
          %197 = dma.hbm_to_vmem [thread:$0]  %s192, 128, %s195, %s181
        $region28: #{tpu_custom_call.1} parent=23 // pred_fallthru
          _
        // Predicated region
        $region29: #{tpu_custom_call.1} parent=23 // pred_check
          %p198 = pneg %p78
        $region30: #{tpu_custom_call.1} parent=23 // pred_check_branch
          %200 = sbr.rel (%p198) target = $region32
        $region31: #{tpu_custom_call.1} parent=23 // pred_region
          %s201 = sand.u32 %s68, 1
          %s202 = scalar_lea.sflag [#allocation10], %s201
          %s203 = sand.u32 %s68, 1
          %s204 = smul.addr %s203, 8
          %s205 = scalar_lea.vmem [#allocation9], %s204
          %s206 = smul.u32 2, %s24
          %s208 = ssub.s32 128, 128
          %209 = vsyncadd %s202, %s208
          %s210 = smul.addr %s23, 2
          %s211 = sadd.s32 %s206, %s210
          %s212 = smul.addr %s211, 64
          %s213 = scalar_lea.hbm %s1, %s212
          %s215 = sshll.u32 %s205, 4
          %s216 = int_to_ptr.vmem [resolvable:$true] %s215
          %218 = dma.hbm_to_vmem [thread:$0]  %s213, 128, %s216, %s202
        $region32: #{tpu_custom_call.1} parent=23 // pred_fallthru
          _
      $region24: #{tpu_custom_call.1} parent=5 // pred_fallthru
        _
      %p219 = scmp.le.s32.totalorder 1, %s16
      %p220 = scmp.lt.s32.totalorder %s16, 3
      %p221 = pnand %p219, %p220
      %p222 = pneg %p221
      // Predicated region
      $region33: #{tpu_custom_call.1} parent=5 // pred_check
        _
      $region34: #{tpu_custom_call.1} parent=5 // pred_check_branch
        %224 = sbr.rel (%p221) target = $region36
      $region35: #{tpu_custom_call.1} parent=5 // pred_region
        %s225 = ssub.s32 %s16, 1
        %s226 = sand.u32 %s43, 1
        %s227 = scalar_lea.sflag [#allocation8], %s226
        %s228 = sand.u32 %s43, 1
        %s229 = smul.addr %s228, 8
        %s230 = scalar_lea.vmem [#allocation7], %s229
        // Predicated region
        $region37: #{tpu_custom_call.1} parent=35 // pred_check
          %p231 = pneg %p56
        $region38: #{tpu_custom_call.1} parent=35 // pred_check_branch
          %233 = sbr.rel (%p231) target = $region40
        $region39: #{tpu_custom_call.1} parent=35 // pred_region
          %234 = dma.done %s227, 128
        $region40: #{tpu_custom_call.1} parent=35 // pred_fallthru
          _
        %s235 = sand.u32 %s71, 1
        %s236 = scalar_lea.sflag [#allocation10], %s235
        %s237 = sand.u32 %s71, 1
        %s238 = smul.addr %s237, 8
        %s239 = scalar_lea.vmem [#allocation9], %s238
        // Predicated region
        $region41: #{tpu_custom_call.1} parent=35 // pred_check
          %p240 = pneg %p84
        $region42: #{tpu_custom_call.1} parent=35 // pred_check_branch
          %242 = sbr.rel (%p240) target = $region44
        $region43: #{tpu_custom_call.1} parent=35 // pred_region
          %243 = dma.done %s236, 128
        $region44: #{tpu_custom_call.1} parent=35 // pred_fallthru
          _
        %s244 = sand.u32 %s43, 1
        %s245 = scalar_lea.sflag [#allocation8], %s244
        %s246 = sand.u32 %s43, 1
        %s247 = smul.addr %s246, 8
        %s248 = scalar_lea.vmem [#allocation7], %s247
        %p249 = pneg %p56
        %p250 = pneg %p53
        %s251 = sand.u32 %s71, 1
        %s252 = scalar_lea.sflag [#allocation10], %s251
        %s253 = sand.u32 %s71, 1
        %s254 = smul.addr %s253, 8
        %s255 = scalar_lea.vmem [#allocation9], %s254
        %p256 = pneg %p84
        %p257 = pneg %p81
        %p258 = pneg %p105
        %p259 = pneg %p102
        %p260 = pneg %p126
        %p261 = pneg %p123
        %p262 = pneg %p152
        %p263 = pneg %p149
        %p264 = scmp.lt.s32.totalorder %s25, 1
        %s265 = scalar_select %p264, %s25, 1
        %s266 = scalar_lea.vmem %s4, %s265
        %s267 = smul.u32 2, %s26
        %s268 = smul.u32 2, %s26
        %p269 = scmp.lt.s32.totalorder %s25, 1
        %s270 = scalar_select %p269, %s25, 1
        %s271 = scalar_lea.vmem %s4, %s270
        %v272 = vld [vmem:[%s230] sm:$0xff]
        %v273 = vld [vmem:[%s239] sm:$0xff]
        %v275 = vcombine.high %v272, %v272
        %vm277 = vcmask 1043456
        %v278 = vsel %vm277, %v272, 0.0
        %v279 = vsel %vm277, %v275, 0.0
        %v280 = vadd.f32 %v278, %v279
        %281 = vadd.xlane.f32.xlu0 %v280
        %v282 = vpop.xlane.xlu0 %281
        %v284 = vcombine.high %v273, %v273
        %v286 = vsel %vm277, %v273, 0.0
        %v287 = vsel %vm277, %v284, 0.0
        %v288 = vadd.f32 %v286, %v287
        %289 = vadd.xlane.f32.xlu0 %v288
        %v290 = vpop.xlane.xlu0 %289
        %v291 = vmul.f32 %v272, %v272
        %v293 = vcombine.high %v291, %v291
        %v295 = vsel %vm277, %v291, 0.0
        %v296 = vsel %vm277, %v293, 0.0
        %v297 = vadd.f32 %v295, %v296
        %298 = vadd.xlane.f32.xlu0 %v297
        %v299 = vpop.xlane.xlu0 %298
        %v300 = vmul.f32 %v273, %v273
        %v302 = vcombine.high %v300, %v300
        %v304 = vsel %vm277, %v300, 0.0
        %v305 = vsel %vm277, %v302, 0.0
        %v306 = vadd.f32 %v304, %v305
        %307 = vadd.xlane.f32.xlu0 %v306
        %v308 = vpop.xlane.xlu0 %307
        %v309 = vmul.f32 %v272, %v273
        %v311 = vcombine.high %v309, %v309
        %v313 = vsel %vm277, %v309, 0.0
        %v314 = vsel %vm277, %v311, 0.0
        %v315 = vadd.f32 %v313, %v314
        %316 = vadd.xlane.f32.xlu0 %v315
        %v317 = vpop.xlane.xlu0 %316
        %p318 = scmp.eq.s32.totalorder %s26, 0
        // Predicated region
        $region45: #{tpu_custom_call.1} parent=35 // pred_check
          %p319 = pneg %p318
        $region46: #{tpu_custom_call.1} parent=35 // pred_check_branch
          %321 = sbr.rel (%p319) target = $region48
        $region47: #{tpu_custom_call.1} parent=35 // pred_region
          %vm322 = vcmask 3072
          %323 = vst.msk [vmem:[#allocation2] sm:$0xf] %vm322, %v282
          %324 = vst.msk [vmem:[#allocation3] sm:$0xf] %vm322, %v290
          %325 = vst.msk [vmem:[#allocation4] sm:$0xf] %vm322, %v299
          %326 = vst.msk [vmem:[#allocation5] sm:$0xf] %vm322, %v308
          %327 = vst.msk [vmem:[#allocation6] sm:$0xf] %vm322, %v317
        $region48: #{tpu_custom_call.1} parent=35 // pred_fallthru
          _
        %p328 = scmp.gt.s32.totalorder %s26, 0
        // Predicated region
        $region49: #{tpu_custom_call.1} parent=35 // pred_check
          %p329 = pneg %p328
        $region50: #{tpu_custom_call.1} parent=35 // pred_check_branch
          %331 = sbr.rel (%p329) target = $region52
        $region51: #{tpu_custom_call.1} parent=35 // pred_region
          %v332 = vld [vmem:[#allocation2] sm:$0xf]
          %v333 = vadd.f32 %v332, %v282
          %vm334 = vcmask 3072
          %335 = vst.msk [vmem:[#allocation2] sm:$0xf] %vm334, %v333
          %v336 = vld [vmem:[#allocation3] sm:$0xf]
          %v337 = vadd.f32 %v336, %v290
          %338 = vst.msk [vmem:[#allocation3] sm:$0xf] %vm334, %v337
          %v339 = vld [vmem:[#allocation4] sm:$0xf]
          %v340 = vadd.f32 %v339, %v299
          %341 = vst.msk [vmem:[#allocation4] sm:$0xf] %vm334, %v340
          %v342 = vld [vmem:[#allocation5] sm:$0xf]
          %v343 = vadd.f32 %v342, %v308
          %344 = vst.msk [vmem:[#allocation5] sm:$0xf] %vm334, %v343
          %v345 = vld [vmem:[#allocation6] sm:$0xf]
          %v346 = vadd.f32 %v345, %v317
          %347 = vst.msk [vmem:[#allocation6] sm:$0xf] %vm334, %v346
        $region52: #{tpu_custom_call.1} parent=35 // pred_fallthru
          _
        // Predicated region
        $region53: #{tpu_custom_call.1} parent=35 // pred_check
          %p348 = pneg %p318
        $region54: #{tpu_custom_call.1} parent=35 // pred_check_branch
          %350 = sbr.rel (%p348) target = $region56
        $region55: #{tpu_custom_call.1} parent=35 // pred_region
          %v351 = vld [vmem:[#allocation2] sm:$0xf]
          %v352 = vmul.f32 %v351, 0.00390625
          %v353 = vld [vmem:[#allocation3] sm:$0xf]
          %v354 = vmul.f32 %v353, 0.00390625
          %v355 = vld [vmem:[#allocation4] sm:$0xf]
          %v356 = vmul.f32 %v355, 0.00390625
          %v357 = vmul.f32 %v352, %v352
          %v358 = vsub.f32 %v356, %v357
          %v359 = vld [vmem:[#allocation5] sm:$0xf]
          %v360 = vmul.f32 %v359, 0.00390625
          %v361 = vmul.f32 %v354, %v354
          %v362 = vsub.f32 %v360, %v361
          %v363 = vld [vmem:[#allocation6] sm:$0xf]
          %v364 = vmul.f32 %v363, 0.00390625
          %v365 = vmul.f32 %v352, %v354
          %v366 = vsub.f32 %v364, %v365
          %v367 = vmul.f32 %v352, 2.0
          %v368 = vmul.f32 %v367, %v354
          %v369 = vadd.f32 %v368, 1e-06
          %v370 = vadd.f32 %v357, %v361
          %v371 = vadd.f32 %v370, 1e-06
          %v372 = vrcp.pop %v371
          %v373 = vmul.f32 %v369, %v372
          %v374 = vmul.f32 %v366, 2.0
          %v375 = vadd.f32 %v374, 1e-06
          %v376 = vadd.f32 %v358, %v362
          %v377 = vadd.f32 %v376, 1e-06
          %v378 = vrcp.pop %v377
          %v379 = vmul.f32 %v375, %v378
          %v380 = vld [vmem:[%s2] sm:$0xf]
          %v381 = vmul.f32 %v380, %v373
          %vm382 = vcmask 3072
          %v383 = vsel %vm382, %v381, 0.0
          %v384 = vrot.slane %v383, 4
          %v385 = vadd.f32 %v383, %v384
          %v386 = vrot.slane %v385, 2
          %v387 = vadd.f32 %v385, %v386
          %v388 = vrot.slane %v387, 1
          %v389 = vadd.f32 %v387, %v388
          %v390 = vld [vmem:[%s3] sm:$0xf]
          %v391 = vmul.f32 %v390, %v379
          %v392 = vsel %vm382, %v391, 0.0
          %v393 = vrot.slane %v392, 4
          %v394 = vadd.f32 %v392, %v393
          %v395 = vrot.slane %v394, 2
          %v396 = vadd.f32 %v394, %v395
          %v397 = vrot.slane %v396, 1
          %v398 = vadd.f32 %v396, %v397
          %v399 = vadd.f32 %v389, %v398
          %vm400 = vcmask 0
          %401 = vst.msk [vmem:[%s271] sm:$0x1] %vm400, %v399
        $region56: #{tpu_custom_call.1} parent=35 // pred_fallthru
          _
        %p402 = scmp.lt.s32.totalorder %s25, 1
        %s403 = scalar_select %p402, %s25, 1
        %s404 = scalar_lea.vmem %s4, %s403
        // Predicated region
        $region57: #{tpu_custom_call.1} parent=35 // pred_check
          %p405 = pneg %p149
        $region58: #{tpu_custom_call.1} parent=35 // pred_check_branch
          %407 = sbr.rel (%p405) target = $region60
        $region59: #{tpu_custom_call.1} parent=35 // pred_region
          _
        $region60: #{tpu_custom_call.1} parent=35 // pred_fallthru
          _
      $region36: #{tpu_custom_call.1} parent=5 // pred_fallthru
        _
      %p408 = scmp.le.s32.totalorder 2, %s16
      // Predicated region
      $region61: #{tpu_custom_call.1} parent=5 // pred_check
        %p409 = pneg %p408
      $region62: #{tpu_custom_call.1} parent=5 // pred_check_branch
        %411 = sbr.rel (%p409) target = $region64
      $region63: #{tpu_custom_call.1} parent=5 // pred_region
        %s412 = ssub.s32 %s16, 2
        // Predicated region
        $region65: #{tpu_custom_call.1} parent=63 // pred_check
          %p413 = pneg %p155
        $region66: #{tpu_custom_call.1} parent=63 // pred_check_branch
          %415 = sbr.rel (%p413) target = $region68
        $region67: #{tpu_custom_call.1} parent=63 // pred_region
          %p416 = scmp.lt.s32.totalorder %s27, 1
          %s417 = scalar_select %p416, %s27, 1
          %s418 = scalar_lea.vmem %s4, %s417
        $region68: #{tpu_custom_call.1} parent=63 // pred_fallthru
          _
      $region64: #{tpu_custom_call.1} parent=5 // pred_fallthru
        _
    $region6: #{tpu_custom_call.1} parent=1 // loop_footer
      %s20 = sadd.s32 1, %s16
    $region7: #{tpu_custom_call.1} parent=1 // loop_footer_branch
      %15 = sbr.rel target = $region3
    $region8: #{tpu_custom_call.1} parent=1 // loop_exit
      _
    %419 = vsyncpa [#allocation8], 1
    %s420 = scalar_lea.sflag [#allocation8], 1
    %421 = vsyncpa %s420, 1
    %422 = vsyncpa [#allocation10], 1
    %s423 = scalar_lea.sflag [#allocation10], 1
    %424 = vsyncpa %s423, 1

</llo_original>
